<compile_context>
chip_gen: v6e
topology: v6e:2x2x1
jax: 0.10.0
libtpu: 0.0.40
codegen_flags: <defaults>
</compile_context>

<pallas_src>
import jax
import jax.numpy as jnp
from jax import lax
from jax.experimental import pallas as pl
from jax.experimental.pallas import tpu as pltpu

_LANE = 128


def _round_up(v, m):
    return (v + m - 1) // m * m


def _patch_embed_kernel(patches_ref, w_ref, pos_ref, cls_ref, out_ref):
    # patches_ref: (Bt, N, Kp)     bf16  unfolded patches (feature order C,kh,kw)
    # w_ref:       (Ep, Kp)        bf16  conv weight, kept in (E, K) orientation
    # pos_ref:     (N, Ep)         f32   pos_embed[patch rows] + conv bias
    # cls_ref:     (n_cls, Ep)     f32   cls_tokens + pos_embed[cls rows]
    # out_ref:     (Bt, n_cls+N, Ep)
    bt, n, kp = patches_ref.shape
    ep = w_ref.shape[0]
    n_cls = cls_ref.shape[0]

    # Merge batch into the matmul M dimension so the MXU sees Bt*N rows.
    x = patches_ref[...].reshape(bt * n, kp)
    y = lax.dot_general(
        x, w_ref[...], (((1,), (1,)), ((), ())),
        preferred_element_type=jnp.float32)                     # (Bt*N, Ep) on MXU
    y = y.reshape(bt, n, ep) + pos_ref[...][None]               # fused bias + pos (f32)

    # cls rows (broadcast over batch) and patch rows, written from the kernel:
    out_ref[:, pl.ds(0, n_cls), :] = jnp.broadcast_to(
        cls_ref[...][None], (bt, n_cls, ep)).astype(out_ref.dtype)
    out_ref[:, pl.ds(n_cls, n), :] = y.astype(out_ref.dtype)


def _choose_batch_tile(B, N, T, Kp, Ep, budget_bytes=20 * 2**20, max_m=4096):
    """Largest divisor of B whose double-buffered in/out tiles fit the budget."""
    best = 1
    for bt in range(1, B + 1):
        if B % bt:
            continue
        if bt * N > max_m:
            continue
        step_bytes = 2 * (bt * N * Kp * 2 + bt * T * Ep * 4)
        if step_bytes <= budget_bytes:
            best = bt
    return best


def patch_embedding(x, conv_w, conv_b, cls_tokens, pos_embed, patch_size):
    """x: (B, C, H, W) float32. Returns (B, n_cls + n_patches, E)."""
    B, C, H, W = x.shape
    P = patch_size
    E = conv_w.shape[0]
    n_cls = cls_tokens.shape[1]
    nph, npw = H // P, W // P
    N = nph * npw
    T = n_cls + N
    K = C * P * P
    Kp = _round_up(K, _LANE)
    Ep = _round_up(E, _LANE)

    # Unfold NCHW image -> (B, N, K) patch vectors with feature order (C,kh,kw),
    # matching nn.Conv2d's (E, C, P, P) weight flattening.
    # TODO(synk): this unfold transpose is a host-side XLA pass over the image;
    # for very large inputs it could be fused into the kernel with strided reads.
    patches = x.reshape(B, C, nph, P, npw, P)
    patches = patches.transpose(0, 2, 4, 1, 3, 5).reshape(B, N, K)
    patches = jnp.pad(patches, ((0, 0), (0, 0), (0, Kp - K))).astype(jnp.bfloat16)

    # Conv weight kept in (E, K) orientation; zero-pad K and E to lane width.
    w_ek = conv_w.reshape(E, K)
    w_ek = jnp.pad(w_ek, ((0, Ep - E), (0, Kp - K))).astype(jnp.bfloat16)

    # Fold the conv bias into the patch-row positional embedding (f32 epilogue).
    pos_patch = pos_embed[0, n_cls:, :] + conv_b[None, :]            # (N, E)
    pos_patch = jnp.pad(pos_patch, ((0, 0), (0, Ep - E)))
    cls_rows = cls_tokens[0] + pos_embed[0, :n_cls, :]               # (n_cls, E)
    cls_rows = jnp.pad(cls_rows, ((0, 0), (0, Ep - E)))

    Bt = _choose_batch_tile(B, N, T, Kp, Ep)
    grid = (B // Bt,)

    # VMEM budget: double-buffered in/out tiles + resident weight/pos/cls + slack.
    vmem_bytes = (2 * (Bt * N * Kp * 2 + Bt * T * Ep * 4)
                  + 2 * (Ep * Kp * 2 + N * Ep * 4 + n_cls * Ep * 4)
                  + (1 << 20))
    vmem_bytes = int(min(max(vmem_bytes, 16 * 2**20), 64 * 2**20))

    out = pl.pallas_call(
        _patch_embed_kernel,
        out_shape=jax.ShapeDtypeStruct((B, T, Ep), x.dtype),
        grid_spec=pltpu.PrefetchScalarGridSpec(
            num_scalar_prefetch=0,
            grid=grid,
            in_specs=[
                pl.BlockSpec((Bt, N, Kp), lambda b: (b, 0, 0)),
                pl.BlockSpec((Ep, Kp), lambda b: (0, 0)),
                pl.BlockSpec((N, Ep), lambda b: (0, 0)),
                pl.BlockSpec((n_cls, Ep), lambda b: (0, 0)),
            ],
            out_specs=pl.BlockSpec((Bt, T, Ep), lambda b: (b, 0, 0)),
        ),
        compiler_params=pltpu.CompilerParams(
            dimension_semantics=("parallel",),
            vmem_limit_bytes=vmem_bytes,
        ),
    )(patches, w_ek, pos_patch, cls_rows)

    if Ep != E:
        out = out[..., :E]   # drop zero-filled lane padding
    return out


def _reference(x, conv_w, conv_b, cls_tokens, pos_embed, patch_size):
    B = x.shape[0]
    y = lax.conv_general_dilated(
        x, conv_w, window_strides=(patch_size, patch_size), padding="VALID",
        dimension_numbers=("NCHW", "OIHW", "NCHW"))
    y = y + conv_b[None, :, None, None]
    E = conv_w.shape[0]
    y = y.reshape(B, E, -1).transpose(0, 2, 1)            # (B, N, E)
    cls = jnp.broadcast_to(cls_tokens, (B, cls_tokens.shape[1], E))
    y = jnp.concatenate([cls, y], axis=1)
    return y + pos_embed


if __name__ == "__main__":
    # Small config consistent with the module: img 16x16, 4x4 patches, 4 ch.
    img_size, patch_size, in_channels, embed_dim, n_cls = 16, 4, 4, 32, 1
    batch = 2
    n_patches = (img_size // patch_size) ** 2

    key = jax.random.PRNGKey(0)
    kx, kw, kb, kc, kpos = jax.random.split(key, 5)

    x = jax.random.normal(kx, (batch, in_channels, img_size, img_size), jnp.float32)
    conv_w = 0.05 * jax.random.normal(
        kw, (embed_dim, in_channels, patch_size, patch_size), jnp.float32)
    conv_b = 0.05 * jax.random.normal(kb, (embed_dim,), jnp.float32)
    # PyTorch initializes these to zeros; use small random values here so the
    # cls/pos paths are exercised non-trivially (still deterministic).
    cls_tokens = 0.02 * jax.random.normal(kc, (1, n_cls, embed_dim), jnp.float32)
    pos_embed = 0.02 * jax.random.normal(
        kpos, (1, n_cls + n_patches, embed_dim), jnp.float32)

    out = patch_embedding(x, conv_w, conv_b, cls_tokens, pos_embed, patch_size)
    out = jax.block_until_ready(out)

    ref = _reference(x, conv_w, conv_b, cls_tokens, pos_embed, patch_size)
    assert out.shape == (batch, n_cls + n_patches, embed_dim), out.shape
    # Matmul inputs are bf16 (f32 accumulation) -> relaxed tolerance vs f32 ref.
    max_err = float(jnp.max(jnp.abs(out - ref)))
    assert jnp.allclose(out, ref, atol=2e-2, rtol=2e-2), f"max_err={max_err}"

    print("KERNEL_OK")
</pallas_src>

<mosaic_0001>
module attributes {stable_mosaic.version = 11 : i64} {
  func.func @_patch_embed_kernel(%arg0: i32, %arg1: memref<2x16x128xbf16, #tpu.memory_space<vmem>>, %arg2: memref<128x128xbf16, #tpu.memory_space<vmem>>, %arg3: memref<16x128xf32, #tpu.memory_space<vmem>>, %arg4: memref<1x128xf32, #tpu.memory_space<vmem>>, %arg5: memref<2x17x128xf32, #tpu.memory_space<vmem>>) attributes {dimension_semantics = [#tpu.dimension_semantics<parallel>], iteration_bounds = array<i64: 1>, scalar_prefetch = 0 : i64, scratch_operands = 0 : i64, tpu.core_type = #tpu.core_type<tc>, window_params = [{transform_indices = @transform_0, window_bounds = array<i64: 2, 16, 128>}, {pipeline_mode = #tpu.pipeline_mode<synchronous>, transform_indices = @transform_1, window_bounds = array<i64: 128, 128>}, {pipeline_mode = #tpu.pipeline_mode<synchronous>, transform_indices = @transform_2, window_bounds = array<i64: 16, 128>}, {pipeline_mode = #tpu.pipeline_mode<synchronous>, transform_indices = @transform_3, window_bounds = array<i64: 1, 128>}, {transform_indices = @transform_4, window_bounds = array<i64: 2, 17, 128>}]} {
    %c0 = arith.constant 0 : index
    %c0_0 = arith.constant 0 : index
    %c0_1 = arith.constant 0 : index
    %0 = vector.load %arg1[%c0, %c0_0, %c0_1] : memref<2x16x128xbf16, #tpu.memory_space<vmem>>, vector<2x16x128xbf16>
    %1 = vector.shape_cast %0 : vector<2x16x128xbf16> to vector<32x128xbf16>
    %c0_2 = arith.constant 0 : index
    %c0_3 = arith.constant 0 : index
    %2 = vector.load %arg2[%c0_2, %c0_3] : memref<128x128xbf16, #tpu.memory_space<vmem>>, vector<128x128xbf16>
    %cst = arith.constant dense<0.000000e+00> : vector<32x128xf32>
    %3 = tpu.matmul %1, %2, %cst {dimension_numbers = #tpu.dot_dimension_numbers<[1], [1], [0], [0], [0, 0, 1, 0], [], []>} : vector<32x128xbf16>, vector<128x128xbf16>, vector<32x128xf32> -> vector<32x128xf32>
    %4 = vector.shape_cast %3 : vector<32x128xf32> to vector<2x16x128xf32>
    %c0_4 = arith.constant 0 : index
    %c0_5 = arith.constant 0 : index
    %5 = vector.load %arg3[%c0_4, %c0_5] : memref<16x128xf32, #tpu.memory_space<vmem>>, vector<16x128xf32>
    %6 = vector.shape_cast %5 : vector<16x128xf32> to vector<1x16x128xf32>
    %7 = vector.broadcast %6 : vector<1x16x128xf32> to vector<2x16x128xf32>
    %8 = arith.addf %4, %7 : vector<2x16x128xf32>
    %c0_6 = arith.constant 0 : index
    %c0_7 = arith.constant 0 : index
    %9 = vector.load %arg4[%c0_6, %c0_7] : memref<1x128xf32, #tpu.memory_space<vmem>>, vector<1x128xf32>
    %10 = vector.shape_cast %9 : vector<1x128xf32> to vector<1x1x128xf32>
    %11 = vector.shape_cast %10 : vector<1x1x128xf32> to vector<1x1x128xf32>
    %12 = vector.broadcast %11 : vector<1x1x128xf32> to vector<2x1x128xf32>
    %c0_8 = arith.constant 0 : index
    %c0_9 = arith.constant 0 : index
    %c0_10 = arith.constant 0 : index
    %13 = vector.load %arg5[%c0_8, %c0_9, %c0_10] : memref<2x17x128xf32, #tpu.memory_space<vmem>>, vector<2x1x128xf32>
    tpu.vector_store %arg5[%c0_8, %c0_9, %c0_10], %12 {strides = array<i32>} : memref<2x17x128xf32, #tpu.memory_space<vmem>>, vector<2x1x128xf32>,
    %c0_11 = arith.constant 0 : index
    %c1 = arith.constant 1 : index
    %c0_12 = arith.constant 0 : index
    %14 = vector.load %arg5[%c0_11, %c1, %c0_12] : memref<2x17x128xf32, #tpu.memory_space<vmem>>, vector<2x16x128xf32>
    tpu.vector_store %arg5[%c0_11, %c1, %c0_12], %8 {strides = array<i32>} : memref<2x17x128xf32, #tpu.memory_space<vmem>>, vector<2x16x128xf32>,
    return
  }
  func.func @transform_0(%arg0: i32) -> (i32, i32, i32) {
    %c0_i32 = arith.constant 0 : i32
    %c0_i32_0 = arith.constant 0 : i32
    %c0_i32_1 = arith.constant 0 : i32
    return %arg0, %c0_i32, %c0_i32_0 : i32, i32, i32
  }
  func.func @transform_1(%arg0: i32) -> (i32, i32) {
    %c0_i32 = arith.constant 0 : i32
    %c0_i32_0 = arith.constant 0 : i32
    %c0_i32_1 = arith.constant 0 : i32
    return %c0_i32, %c0_i32_0 : i32, i32
  }
  func.func @transform_2(%arg0: i32) -> (i32, i32) {
    %c0_i32 = arith.constant 0 : i32
    %c0_i32_0 = arith.constant 0 : i32
    %c0_i32_1 = arith.constant 0 : i32
    return %c0_i32, %c0_i32_0 : i32, i32
  }
  func.func @transform_3(%arg0: i32) -> (i32, i32) {
    %c0_i32 = arith.constant 0 : i32
    %c0_i32_0 = arith.constant 0 : i32
    %c0_i32_1 = arith.constant 0 : i32
    return %c0_i32, %c0_i32_0 : i32, i32
  }
  func.func @transform_4(%arg0: i32) -> (i32, i32, i32) {
    %c0_i32 = arith.constant 0 : i32
    %c0_i32_0 = arith.constant 0 : i32
    %c0_i32_1 = arith.constant 0 : i32
    return %arg0, %c0_i32, %c0_i32_0 : i32, i32, i32
  }
}

</mosaic_0001>

<llo_original>
// kernel: tpu_custom_call.1
$region0: #{tpu_custom_call.1}
  #allocation0 [shape = 'u32[]', space=smem, size = 0x4, offset = 0x4, fixed_abs, tag = 'smem constant byte address 0x4 - core index']
  #allocation1 [shape = 'u32[144,128]{1,0:T(1,128)}', space=vmem, size = 0x12000, scoped, tag = 'internal scratch']
  %s0 = inlined_call_operand.hbm [shape: bf16[2,16,128], index: 0, kind: input, shape index: {}]
  %s1 = inlined_call_operand.hbm [shape: bf16[128,128], index: 1, kind: input, shape index: {}]
  %s2 = inlined_call_operand.hbm [shape: f32[16,128], index: 2, kind: input, shape index: {}]
  %s3 = inlined_call_operand.vmem [shape: f32[1,128], index: 3, kind: input, shape index: {}]
  %s4 = inlined_call_operand.vmem [shape: f32[2,17,128], index: 4, kind: output, shape index: {}]
  %s5 = sld [smem:[#allocation0]]
  $region38: #{tpu_custom_call.1} parent=0
    _
  %s7 = ssub.s32 1, %s5
  %s8 = scalar_select 0, %s7, %s5
  $region1: #{tpu_custom_call.1} parent=0
    #allocation2 [shape = 'u8[8192]{0}', space=vmem, size = 0x2000, scoped, tag = 'input window, operand 0, single buffered']
    #allocation3 [shape = 's32[1]{0}', space=sflag, size = 0x4, scoped, tag = 'scoped memory for tpu_custom_call.1']
    #allocation4 [shape = 'u8[32768]{0}', space=vmem, size = 0x8000, scoped, tag = 'input window, operand 1, single buffered']
    #allocation5 [shape = 's32[1]{0}', space=sflag, size = 0x4, scoped, tag = 'scoped memory for tpu_custom_call.1']
    #allocation6 [shape = 'u8[8192]{0}', space=vmem, size = 0x2000, scoped, tag = 'input window, operand 2, single buffered']
    %9 = vsyncpa [#allocation3], 0
    %10 = vsyncpa [#allocation5], 0
    // Predicated region
    $region2: #{tpu_custom_call.1} parent=1 // pred_check
      _
    $region3: #{tpu_custom_call.1} parent=1 // pred_check_branch
      %12 = sbr.rel (0) target = $region5
    $region4: #{tpu_custom_call.1} parent=1 // pred_region
      %s14 = ssub.s32 256, 256
      %15 = vsyncadd [#allocation3], %s14
      %s16 = sshll.u32 [#allocation2], 4
      %s17 = int_to_ptr.vmem [resolvable:$true] %s16
      %22 = dma.hbm_to_vmem [thread:$0]  %s0, 256, %s17, [#allocation3], 64, 64, 4
    $region5: #{tpu_custom_call.1} parent=1 // pred_fallthru
      _
    // Predicated region
    $region6: #{tpu_custom_call.1} parent=1 // pred_check
      _
    $region7: #{tpu_custom_call.1} parent=1 // pred_check_branch
      %24 = sbr.rel (0) target = $region9
    $region8: #{tpu_custom_call.1} parent=1 // pred_region
      %s26 = ssub.s32 1024, 1024
      %27 = vsyncadd [#allocation5], %s26
      %s28 = sshll.u32 [#allocation4], 4
      %s29 = int_to_ptr.vmem [resolvable:$true] %s28
      %34 = dma.hbm_to_vmem [thread:$0]  %s1, 1024, %s29, [#allocation5], 64, 64, 4
    $region9: #{tpu_custom_call.1} parent=1 // pred_fallthru
      _
    // Predicated region
    $region10: #{tpu_custom_call.1} parent=1 // pred_check
      _
    $region11: #{tpu_custom_call.1} parent=1 // pred_check_branch
      %36 = sbr.rel (0) target = $region13
    $region12: #{tpu_custom_call.1} parent=1 // pred_region
      %s38 = ssub.s32 256, 256
      %39 = vsyncadd [#allocation5], %s38
      %s40 = sshll.u32 [#allocation6], 4
      %s41 = int_to_ptr.vmem [resolvable:$true] %s40
      %46 = dma.hbm_to_vmem [thread:$0]  %s2, 256, %s41, [#allocation5], 128, 128, 8
    $region13: #{tpu_custom_call.1} parent=1 // pred_fallthru
      _
    // Predicated region
    $region14: #{tpu_custom_call.1} parent=1 // pred_check
      _
    $region15: #{tpu_custom_call.1} parent=1 // pred_check_branch
      %48 = sbr.rel (0) target = $region17
    $region16: #{tpu_custom_call.1} parent=1 // pred_region
      _
    $region17: #{tpu_custom_call.1} parent=1 // pred_fallthru
      _
    // Predicated region
    $region18: #{tpu_custom_call.1} parent=1 // pred_check
      _
    $region19: #{tpu_custom_call.1} parent=1 // pred_check_branch
      %50 = sbr.rel (0) target = $region21
    $region20: #{tpu_custom_call.1} parent=1 // pred_region
      %51 = dma.done [#allocation3], 256
    $region21: #{tpu_custom_call.1} parent=1 // pred_fallthru
      _
    // Predicated region
    $region22: #{tpu_custom_call.1} parent=1 // pred_check
      _
    $region23: #{tpu_custom_call.1} parent=1 // pred_check_branch
      %53 = sbr.rel (0) target = $region25
    $region24: #{tpu_custom_call.1} parent=1 // pred_region
      %54 = dma.done [#allocation5], 1024
    $region25: #{tpu_custom_call.1} parent=1 // pred_fallthru
      _
    // Predicated region
    $region26: #{tpu_custom_call.1} parent=1 // pred_check
      _
    $region27: #{tpu_custom_call.1} parent=1 // pred_check_branch
      %56 = sbr.rel (0) target = $region29
    $region28: #{tpu_custom_call.1} parent=1 // pred_region
      %57 = dma.done [#allocation5], 256
    $region29: #{tpu_custom_call.1} parent=1 // pred_fallthru
      _
    %v59 = vld [vmem:[#allocation2] sm:$0xf]
    %v60 = vld [vmem:[#allocation2 + $0x4] sm:$0xf]
    %v61 = vld [vmem:[#allocation2 + $0x8] sm:$0xf]
    %v62 = vld [vmem:[#allocation2 + $0xc] sm:$0xf]
    %v63 = vld [vmem:[#allocation4] sm:$0xf]
    %v64 = vld [vmem:[#allocation4 + $0x4] sm:$0xf]
    %v65 = vld [vmem:[#allocation4 + $0x8] sm:$0xf]
    %v66 = vld [vmem:[#allocation4 + $0xc] sm:$0xf]
    %v67 = vld [vmem:[#allocation4 + $0x10] sm:$0xf]
    %v68 = vld [vmem:[#allocation4 + $0x14] sm:$0xf]
    %v69 = vld [vmem:[#allocation4 + $0x18] sm:$0xf]
    %v70 = vld [vmem:[#allocation4 + $0x1c] sm:$0xf]
    %v71 = vld [vmem:[#allocation4 + $0x20] sm:$0xf]
    %v72 = vld [vmem:[#allocation4 + $0x24] sm:$0xf]
    %v73 = vld [vmem:[#allocation4 + $0x28] sm:$0xf]
    %v74 = vld [vmem:[#allocation4 + $0x2c] sm:$0xf]
    %v75 = vld [vmem:[#allocation4 + $0x30] sm:$0xf]
    %v76 = vld [vmem:[#allocation4 + $0x34] sm:$0xf]
    %v77 = vld [vmem:[#allocation4 + $0x38] sm:$0xf]
    %v78 = vld [vmem:[#allocation4 + $0x3c] sm:$0xf]
    %v83 = vunpack.c.l.b16 %v59
    %v84 = vunpack.c.l.b16 %v60
    %v85 = vunpack.c.l.b16 %v61
    %v86 = vunpack.c.l.b16 %v62
    %v87 = vpack.c.b16 %v84, %v83
    %v88 = vpack.c.b16 %v86, %v85
    %v107 = vunpack.c.l.b16 %v63
    %v108 = vunpack.c.l.b16 %v64
    %v109 = vunpack.c.l.b16 %v65
    %v110 = vunpack.c.l.b16 %v66
    %v111 = vunpack.c.l.b16 %v67
    %v112 = vunpack.c.l.b16 %v68
    %v113 = vunpack.c.l.b16 %v69
    %v114 = vunpack.c.l.b16 %v70
    %v115 = vunpack.c.l.b16 %v71
    %v116 = vunpack.c.l.b16 %v72
    %v117 = vunpack.c.l.b16 %v73
    %v118 = vunpack.c.l.b16 %v74
    %v119 = vunpack.c.l.b16 %v75
    %v120 = vunpack.c.l.b16 %v76
    %v121 = vunpack.c.l.b16 %v77
    %v122 = vunpack.c.l.b16 %v78
    %v123 = vpack.c.b16 %v108, %v107
    %v124 = vpack.c.b16 %v110, %v109
    %v125 = vpack.c.b16 %v112, %v111
    %v126 = vpack.c.b16 %v114, %v113
    %v127 = vpack.c.b16 %v116, %v115
    %v128 = vpack.c.b16 %v118, %v117
    %v129 = vpack.c.b16 %v120, %v119
    %v130 = vpack.c.b16 %v122, %v121
    %139 = vmatprep.subr.bf16.mxu0 0
    %140 = vmatpush1.bf16.xpose.msra.mxu0 %v130
    %141 = vmatprep.subr.bf16.mxu0 0
    %142 = vmatpush1.bf16.xpose.msra.mxu0 %v129
    %143 = vmatprep.subr.bf16.mxu0 0
    %144 = vmatpush1.bf16.xpose.msra.mxu0 %v128
    %145 = vmatprep.subr.bf16.mxu0 0
    %146 = vmatpush1.bf16.xpose.msra.mxu0 %v127
    %147 = vmatprep.subr.bf16.mxu0 0
    %148 = vmatpush1.bf16.xpose.msra.mxu0 %v126
    %149 = vmatprep.subr.bf16.mxu0 0
    %150 = vmatpush1.bf16.xpose.msra.mxu0 %v125
    %151 = vmatprep.subr.bf16.mxu0 0
    %152 = vmatpush1.bf16.xpose.msra.mxu0 %v124
    %153 = vmatprep.subr.bf16.mxu0 0
    %154 = vmatpush1.bf16.xpose.msra.mxu0 %v123
    %155 = vmatprep.subr.bf16.mxu0 0
    %156 = vmatpush2.bf16.xpose.msra.mxu0 0
    %157 = vmatprep.subr.bf16.mxu0 0
    %158 = vmatpush2.bf16.xpose.msra.mxu0 0
    %159 = vmatprep.subr.bf16.mxu0 0
    %160 = vmatpush2.bf16.xpose.msra.mxu0 0
    %161 = vmatprep.subr.bf16.mxu0 0
    %162 = vmatpush2.bf16.xpose.msra.mxu0 0
    %163 = vmatprep.subr.bf16.mxu0 0
    %164 = vmatpush2.bf16.xpose.msra.mxu0 0
    %165 = vmatprep.subr.bf16.mxu0 0
    %166 = vmatpush2.bf16.xpose.msra.mxu0 0
    %167 = vmatprep.subr.bf16.mxu0 0
    %168 = vmatpush2.bf16.xpose.msra.mxu0 0
    %169 = vmatprep.subr.bf16.mxu0 0
    %170 = vmatpush2.bf16.xpose.msra.mxu0 0
    %171 = vmatprep.mubr.bf16.mxu0 0
    %172 = vmatmul.mubr.bf16.gmra.mxu0 %v87
    %v173 = vpop.f32.mrf.mxu0
    %v174 = vadd.f32 0.0, %v173
    %v175 = vpop.f32.mrf.mxu0
    %v176 = vpop.f32.mrf.mxu0
    %v177 = vadd.f32 0.0, %v176
    %v178 = vpop.f32.mrf.mxu0
    %179 = vmatprep.mubr.bf16.mxu0 0
    %180 = vmatmul.mubr.bf16.gmra.mxu0 %v88
    %v181 = vpop.f32.mrf.mxu0
    %v182 = vadd.f32 0.0, %v181
    %v183 = vpop.f32.mrf.mxu0
    %v184 = vpop.f32.mrf.mxu0
    %v185 = vadd.f32 0.0, %v184
    %v186 = vpop.f32.mrf.mxu0
    %187 = vdwg.mxu0
    %v188 = vld [vmem:[#allocation6] sm:$0xff]
    %v189 = vld [vmem:[#allocation6 + $0x8] sm:$0xff]
    %v190 = vadd.f32 %v174, %v188
    %v191 = vadd.f32 %v177, %v189
    %v192 = vadd.f32 %v182, %v188
    %v193 = vadd.f32 %v185, %v189
    %v194 = vld [vmem:[%s3] sm:$0x1]
    %195 = vst [vmem:[%s4] sm:$0x1] %v194
    %196 = vst [vmem:[%s4 + $0x18] sm:$0x1] %v194
    %197 = vst [vmem:[%s4 + $0x1] sm:$0xff] %v190
    %198 = vst [vmem:[%s4 + $0x9] sm:$0xff] %v191
    %199 = vst [vmem:[%s4 + $0x19] sm:$0xff] %v192
    %200 = vst [vmem:[%s4 + $0x21] sm:$0xff] %v193
    // Predicated region
    $region30: #{tpu_custom_call.1} parent=1 // pred_check
      _
    $region31: #{tpu_custom_call.1} parent=1 // pred_check_branch
      %202 = sbr.rel (0) target = $region33
    $region32: #{tpu_custom_call.1} parent=1 // pred_region
      _
    $region33: #{tpu_custom_call.1} parent=1 // pred_fallthru
      _
    // Predicated region
    $region34: #{tpu_custom_call.1} parent=1 // pred_check
      _
    $region35: #{tpu_custom_call.1} parent=1 // pred_check_branch
      %204 = sbr.rel (0) target = $region37
    $region36: #{tpu_custom_call.1} parent=1 // pred_region
      _
    $region37: #{tpu_custom_call.1} parent=1 // pred_fallthru
      _
    %205 = vsyncpa [#allocation3], 1
    %206 = vsyncpa [#allocation5], 1

</llo_original>
